<compile_context>
chip_gen: v5e
topology: v5e:2x2
jax: 0.10.0
libtpu: 0.0.40
codegen_flags: <defaults>
</compile_context>

<pallas_src>
import functools
import math

import numpy as np
import jax
import jax.numpy as jnp
from jax import lax
from jax.experimental import pallas as pl
from jax.experimental.pallas import tpu as pltpu

LN_EPS = 1e-6                 # matches LayerNorm(eps=1e-6) / ln_eps=1e-6 in the module
_GELU_C = math.sqrt(2.0 / math.pi)


def _ln_rows(y, gamma_row, beta_row, n_real, eps=LN_EPS):
    """LayerNorm over the last dim; padded lanes of `y` must be exactly 0.

    Uses E[y^2] - mu^2 so zero pad-lanes drop out of both sums (divide by the
    real channel count n_real)."""
    inv_n = 1.0 / float(n_real)
    s1 = jnp.sum(y, axis=-1, keepdims=True)
    s2 = jnp.sum(y * y, axis=-1, keepdims=True)
    mu = s1 * inv_n
    var = s2 * inv_n - mu * mu
    return (y - mu) * lax.rsqrt(var + eps) * gamma_row + beta_row


# --------------------------------------------------------------------------
# Kernels
# --------------------------------------------------------------------------
def _reduce_ln_kernel(x_ref, w_ref, vec_ref, o_ref, *, hC):
    """o = LN_channels_first(x @ W_red + b_red).  vec rows: (bias, gamma, beta)."""
    y = jnp.dot(x_ref[...].astype(jnp.bfloat16), w_ref[...],
                preferred_element_type=jnp.float32) + vec_ref[0:1, :]
    o_ref[...] = _ln_rows(y, vec_ref[1:2, :], vec_ref[2:3, :], hC)


def _tcm_core_kernel(h_ref, wqkv_ref, wo_ref, slab_ref, o_ref, hpad_ref,
                     *, ks, num_heads, hC):
    """PosEncConv + MHA + residual + LayerNorm for one batch element.

    h_ref: [1, T, hCp].  slab rows: dw[0:ks], then b_dw, g_pos, be_pos,
    bq, bk, bv, bo, g_ln1, be_ln1.  hpad_ref: VMEM halo scratch."""
    T, hCp = h_ref.shape[1], h_ref.shape[2]
    pad = (ks - 1) // 2
    D = hC // num_heads
    scale = 1.0 / math.sqrt(D)

    h0 = h_ref[0]                                             # [T, hCp] f32

    # --- PosEncConv: ks-tap depthwise conv from an in-VMEM halo (no HBM pad)
    hpad_ref[...] = jnp.zeros(hpad_ref.shape, jnp.float32)
    hpad_ref[pad:pad + T, :] = h0
    acc = jnp.zeros((T, hCp), jnp.float32)
    for t in range(ks):                                       # static, unrolled
        # TODO(synk): replace unaligned sublane slices with pltpu.roll + mask.
        acc = acc + hpad_ref[t:t + T, :] * slab_ref[t:t + 1, :]
    h = h0 + _ln_rows(acc + slab_ref[ks:ks + 1, :],
                      slab_ref[ks + 1:ks + 2, :], slab_ref[ks + 2:ks + 3, :], hC)

    # --- MultiHeadAttention + residual + LayerNorm (bf16 MXU, f32 accum)
    hb = h.astype(jnp.bfloat16)
    q = (jnp.dot(hb, wqkv_ref[0], preferred_element_type=jnp.float32)
         + slab_ref[ks + 3:ks + 4, :]) * scale
    k = (jnp.dot(hb, wqkv_ref[1], preferred_element_type=jnp.float32)
         + slab_ref[ks + 4:ks + 5, :])
    v = (jnp.dot(hb, wqkv_ref[2], preferred_element_type=jnp.float32)
         + slab_ref[ks + 5:ks + 6, :])

    parts = []
    for hh in range(num_heads):
        sl = slice(hh * D, (hh + 1) * D)
        # TODO(synk): head-major layout to avoid D=8 lane slices at larger D.
        s = lax.dot_general(q[:, sl].astype(jnp.bfloat16),
                            k[:, sl].astype(jnp.bfloat16),
                            (((1,), (1,)), ((), ())),
                            preferred_element_type=jnp.float32)
        s = s - jnp.max(s, axis=-1, keepdims=True)
        e = jnp.exp(s)
        pr = e * pl.reciprocal(jnp.sum(e, axis=-1, keepdims=True), approx=True)
        parts.append(jnp.dot(pr.astype(jnp.bfloat16),
                             v[:, sl].astype(jnp.bfloat16),
                             preferred_element_type=jnp.float32))
    ctx = jnp.concatenate(parts, axis=-1)                     # [T, hC]
    attn = jnp.dot(ctx.astype(jnp.bfloat16), wo_ref[...],     # ONE full-K out-proj
                   preferred_element_type=jnp.float32)
    y = h + attn + slab_ref[ks + 6:ks + 7, :]
    o_ref[0] = _ln_rows(y, slab_ref[ks + 7:ks + 8, :], slab_ref[ks + 8:ks + 9, :], hC)


def _ffn_exp_kernel(h_ref, skip_ref, w1_ref, b1_ref, w2_ref, vec_ref,
                    wexp_ref, bexp_ref, o_ref, *, hC):
    """o = skip + LN(h + FFN(h)) @ W_exp + b_exp.  vec rows: (b2, gamma, beta)."""
    h = h_ref[...]
    t = jnp.dot(h.astype(jnp.bfloat16), w1_ref[...],
                preferred_element_type=jnp.float32) + b1_ref[...]
    t = 0.5 * t * (1.0 + jnp.tanh(_GELU_C * (t + 0.044715 * t * t * t)))  # NewGELU
    f = jnp.dot(t.astype(jnp.bfloat16), w2_ref[...],
                preferred_element_type=jnp.float32) + vec_ref[0:1, :]
    y = _ln_rows(h + f, vec_ref[1:2, :], vec_ref[2:3, :], hC)
    o_ref[...] = (skip_ref[...]
                  + jnp.dot(y.astype(jnp.bfloat16), wexp_ref[...],
                            preferred_element_type=jnp.float32)
                  + bexp_ref[...])


# --------------------------------------------------------------------------
# Wrapper
# --------------------------------------------------------------------------
def time_context_block_forward(x_bct, kp, *, tile_rows=1024, num_heads=4):
    """x_bct: [B, C, T] (PyTorch layout).  kp: packed params.  Returns [B, C, T]."""
    B, C, T = x_bct.shape
    hC, ks = kp["hC"], kp["ks"]
    hCp = kp["w_red"].shape[1]          # hidden channels padded to 128 lanes
    iCp = kp["w1"].shape[1]             # FFN intermediate padded to 128 lanes
    assert hC % num_heads == 0

    x = jnp.transpose(x_bct, (0, 2, 1)).astype(jnp.float32)      # [B, T, C]
    M = B * T
    tm = max(8, (min(tile_rows, M) // 8) * 8)
    mp = pl.cdiv(M, tm) * tm
    x_flat = x.reshape(M, C)
    x_pad = x_flat if mp == M else jnp.pad(x_flat, ((0, mp - M), (0, 0)))

    cparams = pltpu.CompilerParams(dimension_semantics=("parallel",),
                                   vmem_limit_bytes=64 * 1024 * 1024)
    rows = lambda w: pl.BlockSpec((tm, w), lambda i: (i, 0))
    const2 = lambda shape: pl.BlockSpec(shape, lambda i: (0, 0))

    # ---- k1: red_dim 1x1 conv + channels-first LayerNorm (row grid) ----
    h0_flat = pl.pallas_call(
        functools.partial(_reduce_ln_kernel, hC=hC),
        out_shape=jax.ShapeDtypeStruct((mp, hCp), jnp.float32),
        grid=(mp // tm,),
        in_specs=[rows(C), const2((C, hCp)), const2((3, hCp))],
        out_specs=rows(hCp),
        compiler_params=cparams,
    )(x_pad, kp["w_red"], kp["vec_red"])
    h0 = (h0_flat if mp == M else h0_flat[:M]).reshape(B, T, hCp)

    # ---- k2: PosEncConv + MHA + residual + LayerNorm (batch grid) ----
    Tp_r = ((T + ks - 1 + 7) // 8) * 8                          # halo scratch rows
    batch3 = pl.BlockSpec((1, T, hCp), lambda b: (b, 0, 0))
    h2 = pl.pallas_call(
        functools.partial(_tcm_core_kernel, ks=ks, num_heads=num_heads, hC=hC),
        out_shape=jax.ShapeDtypeStruct((B, T, hCp), jnp.float32),
        grid=(B,),
        in_specs=[batch3,
                  pl.BlockSpec((3, hCp, hCp), lambda b: (0, 0, 0)),
                  pl.BlockSpec((hC, hCp), lambda b: (0, 0)),
                  pl.BlockSpec((ks + 9, hCp), lambda b: (0, 0))],
        out_specs=batch3,
        scratch_shapes=[pltpu.VMEM((Tp_r, hCp), jnp.float32)],
        compiler_params=cparams,
    )(h0, kp["wqkv"], kp["wo"], kp["slab_attn"])

    # ---- k3: FFN + final LN + exp_dim 1x1 conv + skip (row grid) ----
    h2_flat = h2.reshape(M, hCp)
    h2_pad = h2_flat if mp == M else jnp.pad(h2_flat, ((0, mp - M), (0, 0)))
    out_flat = pl.pallas_call(
        functools.partial(_ffn_exp_kernel, hC=hC),
        out_shape=jax.ShapeDtypeStruct((mp, C), jnp.float32),
        grid=(mp // tm,),
        in_specs=[rows(hCp), rows(C),
                  const2((hCp, iCp)), const2((1, iCp)),
                  const2((iCp, hCp)), const2((3, hCp)),
                  const2((hCp, C)), const2((1, C))],
        out_specs=rows(C),
        compiler_params=cparams,
    )(h2_pad, x_pad, kp["w1"], kp["b1_row"], kp["w2"], kp["vec_ffn"],
      kp["w_exp"], kp["bexp_row"])
    out = (out_flat if mp == M else out_flat[:M]).reshape(B, T, C)
    return jnp.transpose(out, (0, 2, 1))                        # back to [B, C, T]


# --------------------------------------------------------------------------
# Parameters
# --------------------------------------------------------------------------
def init_params(key, C, hC, ks=59):
    """Raw (unpadded, f32) parameters; weights stored [in, out] so x @ W."""
    keys = iter(jax.random.split(key, 26))

    def w(shape, s=0.1):
        return s * jax.random.normal(next(keys), shape, jnp.float32)

    def gamma(n):
        return 1.0 + 0.1 * jax.random.normal(next(keys), (n,), jnp.float32)

    return {
        "w_red": w((C, hC)), "b_red": w((hC,)), "g_red": gamma(hC), "be_red": w((hC,)),
        "dw": w((ks, hC)), "b_dw": w((hC,)), "g_pos": gamma(hC), "be_pos": w((hC,)),
        "wq": w((hC, hC)), "bq": w((hC,)), "wk": w((hC, hC)), "bk": w((hC,)),
        "wv": w((hC, hC)), "bv": w((hC,)), "wo": w((hC, hC)), "bo": w((hC,)),
        "g_ln1": gamma(hC), "be_ln1": w((hC,)),
        "w1": w((hC, 2 * hC)), "b1": w((2 * hC,)),
        "w2": w((2 * hC, hC)), "b2": w((hC,)),
        "g_ln2": gamma(hC), "be_ln2": w((hC,)),
        "w_exp": w((hC, C)), "b_exp": w((C,)),
    }


def pack_params(p, *, lane=128):
    """Kernel-side params: zero-pad hidden channels to 128 lanes, cast matmul
    weights to bf16, and pack small per-channel vectors into slabs."""
    C, hC = p["w_red"].shape
    ks = p["dw"].shape[0]
    iC = p["w1"].shape[1]
    rup = lambda n: ((n + lane - 1) // lane) * lane
    hCp, iCp = rup(hC), rup(iC)
    bf = jnp.bfloat16

    def padlast(a, n):
        return jnp.pad(a, [(0, 0)] * (a.ndim - 1) + [(0, n - a.shape[-1])])

    def pad2(a, r, c):
        return jnp.pad(a, ((0, r - a.shape[0]), (0, c - a.shape[1])))

    slab = jnp.concatenate(
        [padlast(p["dw"], hCp)]
        + [padlast(v, hCp)[None, :] for v in
           (p["b_dw"], p["g_pos"], p["be_pos"], p["bq"], p["bk"], p["bv"],
            p["bo"], p["g_ln1"], p["be_ln1"])], axis=0)           # [ks+9, hCp] f32

    return {
        "w_red": padlast(p["w_red"], hCp).astype(bf),             # [C, hCp]
        "vec_red": jnp.stack([padlast(p["b_red"], hCp),
                              padlast(p["g_red"], hCp),
                              padlast(p["be_red"], hCp)]),        # [3, hCp]
        "wqkv": jnp.stack([pad2(p["wq"], hCp, hCp),
                           pad2(p["wk"], hCp, hCp),
                           pad2(p["wv"], hCp, hCp)]).astype(bf),  # [3, hCp, hCp]
        "wo": padlast(p["wo"], hCp).astype(bf),                   # [hC, hCp]
        "slab_attn": slab,
        "w1": pad2(p["w1"], hCp, iCp).astype(bf),                 # [hCp, iCp]
        "b1_row": padlast(p["b1"], iCp)[None, :],                 # [1, iCp]
        "w2": pad2(p["w2"], iCp, hCp).astype(bf),                 # [iCp, hCp]
        "vec_ffn": jnp.stack([padlast(p["b2"], hCp),
                              padlast(p["g_ln2"], hCp),
                              padlast(p["be_ln2"], hCp)]),        # [3, hCp]
        "w_exp": jnp.pad(p["w_exp"], ((0, hCp - hC), (0, 0))).astype(bf),  # [hCp, C]
        "bexp_row": p["b_exp"][None, :],                          # [1, C]
        "hC": int(hC), "ks": int(ks),
    }


# --------------------------------------------------------------------------
# Pure-JAX reference (mirrors the PyTorch forward, eval mode / dropout p=0)
# --------------------------------------------------------------------------
def ref_forward(x_bct, p, *, num_heads=4, eps=LN_EPS):
    B, C, T = x_bct.shape
    hC = p["w_red"].shape[1]
    x = jnp.transpose(x_bct, (0, 2, 1)).astype(jnp.float32)      # [B, T, C]

    def ln(y, g, b):
        mu = y.mean(-1, keepdims=True)
        d = y - mu
        v = (d * d).mean(-1, keepdims=True)
        return d / jnp.sqrt(v + eps) * g + b

    h = ln(x @ p["w_red"] + p["b_red"], p["g_red"], p["be_red"])

    ks = p["dw"].shape[0]
    pad = (ks - 1) // 2
    hp = jnp.pad(h, ((0, 0), (pad, pad), (0, 0)))
    conv = sum(hp[:, t:t + T, :] * p["dw"][t][None, None, :] for t in range(ks))
    h = h + ln(conv + p["b_dw"], p["g_pos"], p["be_pos"])

    D = hC // num_heads
    q = (h @ p["wq"] + p["bq"]) * (D ** -0.5)
    k_ = h @ p["wk"] + p["bk"]
    v_ = h @ p["wv"] + p["bv"]

    def split(t):
        return t.reshape(B, T, num_heads, D).transpose(0, 2, 1, 3)

    qh, kh, vh = split(q), split(k_), split(v_)
    s = jnp.einsum("bhtd,bhsd->bhts", qh, kh)
    pr = jax.nn.softmax(s, axis=-1)
    ctx = jnp.einsum("bhts,bhsd->bhtd", pr, vh).transpose(0, 2, 1, 3).reshape(B, T, hC)
    h = ln(h + ctx @ p["wo"] + p["bo"], p["g_ln1"], p["be_ln1"])

    t1 = h @ p["w1"] + p["b1"]
    t1 = 0.5 * t1 * (1.0 + jnp.tanh(_GELU_C * (t1 + 0.044715 * t1 ** 3)))
    h = ln(h + t1 @ p["w2"] + p["b2"], p["g_ln2"], p["be_ln2"])

    out = x + h @ p["w_exp"] + p["b_exp"]
    return jnp.transpose(out, (0, 2, 1))


# --------------------------------------------------------------------------
if __name__ == "__main__":
    key = jax.random.PRNGKey(0)
    B, C, hC, T = 2, 64, 32, 64            # TimeContextBlock1d(C=64, hC=32), seq=64
    kx, kp = jax.random.split(key)
    x = jax.random.normal(kx, (B, C, T), jnp.float32)
    raw = init_params(kp, C, hC, ks=59)
    packed = pack_params(raw)

    out = jax.block_until_ready(time_context_block_forward(x, packed))
    with jax.default_matmul_precision("highest"):                # scoped, not global
        ref = jax.block_until_ready(ref_forward(x, raw))

    # Kernel uses bf16 MXU operands with f32 accumulation; reference is full f32,
    # so allow bf16-class tolerance.
    np.testing.assert_allclose(np.asarray(out), np.asarray(ref),
                               rtol=2e-2, atol=5e-2)
    print("KERNEL_OK")
</pallas_src>

<mosaic_0001>
module attributes {stable_mosaic.version = 11 : i64} {
  func.func @_reduce_ln_kernel(%arg0: i32, %arg1: memref<128x64xf32, #tpu.memory_space<vmem>>, %arg2: memref<64x128xbf16, #tpu.memory_space<vmem>>, %arg3: memref<3x128xf32, #tpu.memory_space<vmem>>, %arg4: memref<128x128xf32, #tpu.memory_space<vmem>>) attributes {dimension_semantics = [#tpu.dimension_semantics<parallel>], iteration_bounds = array<i64: 1>, scalar_prefetch = 0 : i64, scratch_operands = 0 : i64, tpu.core_type = #tpu.core_type<tc>, window_params = [{transform_indices = @transform_0, window_bounds = array<i64: 128, 64>}, {pipeline_mode = #tpu.pipeline_mode<synchronous>, transform_indices = @transform_1, window_bounds = array<i64: 64, 128>}, {pipeline_mode = #tpu.pipeline_mode<synchronous>, transform_indices = @transform_2, window_bounds = array<i64: 3, 128>}, {transform_indices = @transform_3, window_bounds = array<i64: 128, 128>}]} {
    %c0 = arith.constant 0 : index
    %c0_0 = arith.constant 0 : index
    %0 = vector.load %arg1[%c0, %c0_0] : memref<128x64xf32, #tpu.memory_space<vmem>>, vector<128x64xf32>
    %1 = arith.truncf %0 : vector<128x64xf32> to vector<128x64xbf16>
    %c0_1 = arith.constant 0 : index
    %c0_2 = arith.constant 0 : index
    %2 = vector.load %arg2[%c0_1, %c0_2] : memref<64x128xbf16, #tpu.memory_space<vmem>>, vector<64x128xbf16>
    %cst = arith.constant dense<0.000000e+00> : vector<128x128xf32>
    %3 = tpu.matmul %1, %2, %cst {dimension_numbers = #tpu.dot_dimension_numbers<[1], [0], [0], [1], [0, 0, 1, 1], [], []>} : vector<128x64xbf16>, vector<64x128xbf16>, vector<128x128xf32> -> vector<128x128xf32>
    %c0_3 = arith.constant 0 : index
    %c0_4 = arith.constant 0 : index
    %4 = vector.load %arg3[%c0_3, %c0_4] : memref<3x128xf32, #tpu.memory_space<vmem>>, vector<1x128xf32>
    %5 = vector.broadcast %4 : vector<1x128xf32> to vector<128x128xf32>
    %6 = arith.addf %3, %5 : vector<128x128xf32>
    %c1 = arith.constant 1 : index
    %c0_5 = arith.constant 0 : index
    %7 = vector.load %arg3[%c1, %c0_5] : memref<3x128xf32, #tpu.memory_space<vmem>>, vector<1x128xf32>
    %c2 = arith.constant 2 : index
    %c0_6 = arith.constant 0 : index
    %8 = vector.load %arg3[%c2, %c0_6] : memref<3x128xf32, #tpu.memory_space<vmem>>, vector<1x128xf32>
    %cst_7 = arith.constant dense<0.000000e+00> : vector<128xf32>
    %9 = vector.multi_reduction <add>, %6, %cst_7 [1] : vector<128x128xf32> to vector<128xf32>
    %10 = vector.shape_cast %9 : vector<128xf32> to vector<128x1xf32>
    %11 = arith.mulf %6, %6 : vector<128x128xf32>
    %cst_8 = arith.constant dense<0.000000e+00> : vector<128xf32>
    %12 = vector.multi_reduction <add>, %11, %cst_8 [1] : vector<128x128xf32> to vector<128xf32>
    %13 = vector.shape_cast %12 : vector<128xf32> to vector<128x1xf32>
    %cst_9 = arith.constant 3.125000e-02 : f32
    %14 = vector.broadcast %cst_9 : f32 to vector<128x1xf32>
    %15 = arith.mulf %10, %14 : vector<128x1xf32>
    %cst_10 = arith.constant 3.125000e-02 : f32
    %16 = vector.broadcast %cst_10 : f32 to vector<128x1xf32>
    %17 = arith.mulf %13, %16 : vector<128x1xf32>
    %18 = arith.mulf %15, %15 : vector<128x1xf32>
    %19 = arith.subf %17, %18 : vector<128x1xf32>
    %20 = vector.broadcast %15 : vector<128x1xf32> to vector<128x128xf32>
    %21 = arith.subf %6, %20 : vector<128x128xf32>
    %cst_11 = arith.constant 9.99999997E-7 : f32
    %22 = vector.broadcast %cst_11 : f32 to vector<128x1xf32>
    %23 = arith.addf %19, %22 : vector<128x1xf32>
    %24 = math.rsqrt %23 : vector<128x1xf32>
    %25 = vector.broadcast %24 : vector<128x1xf32> to vector<128x128xf32>
    %26 = arith.mulf %21, %25 : vector<128x128xf32>
    %27 = vector.broadcast %7 : vector<1x128xf32> to vector<128x128xf32>
    %28 = arith.mulf %26, %27 : vector<128x128xf32>
    %29 = vector.broadcast %8 : vector<1x128xf32> to vector<128x128xf32>
    %30 = arith.addf %28, %29 : vector<128x128xf32>
    %c0_12 = arith.constant 0 : index
    %c0_13 = arith.constant 0 : index
    %31 = vector.load %arg4[%c0_12, %c0_13] : memref<128x128xf32, #tpu.memory_space<vmem>>, vector<128x128xf32>
    tpu.vector_store %arg4[%c0_12, %c0_13], %30 {strides = array<i32>} : memref<128x128xf32, #tpu.memory_space<vmem>>, vector<128x128xf32>,
    return
  }
  func.func @transform_0(%arg0: i32) -> (i32, i32) {
    %c0_i32 = arith.constant 0 : i32
    %c0_i32_0 = arith.constant 0 : i32
    return %arg0, %c0_i32 : i32, i32
  }
  func.func @transform_1(%arg0: i32) -> (i32, i32) {
    %c0_i32 = arith.constant 0 : i32
    %c0_i32_0 = arith.constant 0 : i32
    %c0_i32_1 = arith.constant 0 : i32
    return %c0_i32, %c0_i32_0 : i32, i32
  }
  func.func @transform_2(%arg0: i32) -> (i32, i32) {
    %c0_i32 = arith.constant 0 : i32
    %c0_i32_0 = arith.constant 0 : i32
    %c0_i32_1 = arith.constant 0 : i32
    return %c0_i32, %c0_i32_0 : i32, i32
  }
  func.func @transform_3(%arg0: i32) -> (i32, i32) {
    %c0_i32 = arith.constant 0 : i32
    %c0_i32_0 = arith.constant 0 : i32
    return %arg0, %c0_i32 : i32, i32
  }
}

</mosaic_0001>

<llo_original>
// kernel: tpu_custom_call.1
$region0: #{tpu_custom_call.1}
  #allocation0 [shape = 'u32[]', space=smem, size = 0x4, offset = 0x4, fixed_abs, tag = 'smem constant byte address 0x4 - core index']
  #allocation1 [shape = 'u32[72,128]{1,0:T(1,128)}', space=vmem, size = 0x9000, scoped, tag = 'internal scratch']
  %s0 = inlined_call_operand.vmem [shape: f32[128,64], index: 0, kind: input, shape index: {}]
  %s1 = inlined_call_operand.vmem [shape: bf16[64,128], index: 1, kind: input, shape index: {}]
  %s2 = inlined_call_operand.vmem [shape: f32[3,128], index: 2, kind: input, shape index: {}]
  %s3 = inlined_call_operand.hbm [shape: f32[128,128], index: 3, kind: output, shape index: {}]
  %s4 = sld [smem:[#allocation0]]
  $region22: #{tpu_custom_call.1} parent=0
    _
  %s6 = ssub.s32 1, %s4
  %s7 = scalar_select 0, %s6, %s4
  $region1: #{tpu_custom_call.1} parent=0
    #allocation2 [shape = 'u8[65536]{0}', space=vmem, size = 0x10000, scoped, tag = 'output window, operand 0, single buffered']
    #allocation3 [shape = 's32[1]{0}', space=sflag, size = 0x4, scoped, tag = 'scoped memory for tpu_custom_call.1']
    %8 = vsyncpa [#allocation3], 0
    // Predicated region
    $region2: #{tpu_custom_call.1} parent=1 // pred_check
      _
    $region3: #{tpu_custom_call.1} parent=1 // pred_check_branch
      %10 = sbr.rel (0) target = $region5
    $region4: #{tpu_custom_call.1} parent=1 // pred_region
      _
    $region5: #{tpu_custom_call.1} parent=1 // pred_fallthru
      _
    // Predicated region
    $region6: #{tpu_custom_call.1} parent=1 // pred_check
      _
    $region7: #{tpu_custom_call.1} parent=1 // pred_check_branch
      %12 = sbr.rel (0) target = $region9
    $region8: #{tpu_custom_call.1} parent=1 // pred_region
      _
    $region9: #{tpu_custom_call.1} parent=1 // pred_fallthru
      _
    // Predicated region
    $region10: #{tpu_custom_call.1} parent=1 // pred_check
      _
    $region11: #{tpu_custom_call.1} parent=1 // pred_check_branch
      %14 = sbr.rel (0) target = $region13
    $region12: #{tpu_custom_call.1} parent=1 // pred_region
      _
    $region13: #{tpu_custom_call.1} parent=1 // pred_fallthru
      _
    %v16 = vld [vmem:[%s0] sm:$0xff]
    %v17 = vld [vmem:[%s0 + $0x8] sm:$0xff]
    %v18 = vld [vmem:[%s0 + $0x10] sm:$0xff]
    %v19 = vld [vmem:[%s0 + $0x18] sm:$0xff]
    %v20 = vld [vmem:[%s0 + $0x20] sm:$0xff]
    %v21 = vld [vmem:[%s0 + $0x28] sm:$0xff]
    %v22 = vld [vmem:[%s0 + $0x30] sm:$0xff]
    %v23 = vld [vmem:[%s0 + $0x38] sm:$0xff]
    %v24 = vld [vmem:[%s0 + $0x40] sm:$0xff]
    %v25 = vld [vmem:[%s0 + $0x48] sm:$0xff]
    %v26 = vld [vmem:[%s0 + $0x50] sm:$0xff]
    %v27 = vld [vmem:[%s0 + $0x58] sm:$0xff]
    %v28 = vld [vmem:[%s0 + $0x60] sm:$0xff]
    %v29 = vld [vmem:[%s0 + $0x68] sm:$0xff]
    %v30 = vld [vmem:[%s0 + $0x70] sm:$0xff]
    %v31 = vld [vmem:[%s0 + $0x78] sm:$0xff]
    %v32 = vpack.c.bf16 %v17, %v16
    %v33 = vpack.c.bf16 %v19, %v18
    %v34 = vpack.c.bf16 %v21, %v20
    %v35 = vpack.c.bf16 %v23, %v22
    %v36 = vpack.c.bf16 %v25, %v24
    %v37 = vpack.c.bf16 %v27, %v26
    %v38 = vpack.c.bf16 %v29, %v28
    %v39 = vpack.c.bf16 %v31, %v30
    %v40 = vld [vmem:[%s1] sm:$0xf]
    %v41 = vld [vmem:[%s1 + $0x4] sm:$0xf]
    %v42 = vld [vmem:[%s1 + $0x8] sm:$0xf]
    %v43 = vld [vmem:[%s1 + $0xc] sm:$0xf]
    %v44 = vld [vmem:[%s1 + $0x10] sm:$0xf]
    %v45 = vld [vmem:[%s1 + $0x14] sm:$0xf]
    %v46 = vld [vmem:[%s1 + $0x18] sm:$0xf]
    %v47 = vld [vmem:[%s1 + $0x1c] sm:$0xf]
    %v48 = vld [vmem:[%s2] sm:$0x1]
    %v49 = vperm.slane %v48, 0
    %v58 = vunpack.c.l.b16 %v40
    %v59 = vunpack.c.l.b16 %v41
    %v60 = vunpack.c.l.b16 %v42
    %v61 = vunpack.c.l.b16 %v43
    %v62 = vunpack.c.l.b16 %v44
    %v63 = vunpack.c.l.b16 %v45
    %v64 = vunpack.c.l.b16 %v46
    %v65 = vunpack.c.l.b16 %v47
    %v66 = vpack.c.b16 %v59, %v58
    %v67 = vpack.c.b16 %v61, %v60
    %v68 = vpack.c.b16 %v63, %v62
    %v69 = vpack.c.b16 %v65, %v64
    %vm74 = vcmask 523264
    %v76 = vsel %vm74, %v32, 0
    %v79 = vsel %vm74, %v33, 0
    %v82 = vsel %vm74, %v34, 0
    %v85 = vsel %vm74, %v35, 0
    %v88 = vsel %vm74, %v36, 0
    %v91 = vsel %vm74, %v37, 0
    %v94 = vsel %vm74, %v38, 0
    %v97 = vsel %vm74, %v39, 0
    %99 = vmatpush.bf16.msra.mxu0 0
    %100 = vmatpush.bf16.msra.mxu0 0
    %101 = vmatpush.bf16.msra.mxu0 0
    %102 = vmatpush.bf16.msra.mxu0 0
    %103 = vmatpush.bf16.msra.mxu0 %v69
    %104 = vmatpush.bf16.msra.mxu0 %v68
    %105 = vmatpush.bf16.msra.mxu0 %v67
    %106 = vmatpush.bf16.msra.mxu0 %v66
    %107 = vmatmul.bf16.gmra.mxu0 %v76
    %v108 = vpop.f32.mrf.mxu0
    %v109 = vadd.f32 %v49, %v108
    %v110 = vpop.f32.mrf.mxu0
    %v111 = vadd.f32 %v49, %v110
    %112 = vmatmul.bf16.gmra.mxu0 %v79
    %v113 = vpop.f32.mrf.mxu0
    %v114 = vadd.f32 %v49, %v113
    %v115 = vpop.f32.mrf.mxu0
    %v116 = vadd.f32 %v49, %v115
    %117 = vmatmul.bf16.gmra.mxu0 %v82
    %v118 = vpop.f32.mrf.mxu0
    %v119 = vadd.f32 %v49, %v118
    %v120 = vpop.f32.mrf.mxu0
    %v121 = vadd.f32 %v49, %v120
    %122 = vmatmul.bf16.gmra.mxu0 %v85
    %v123 = vpop.f32.mrf.mxu0
    %v124 = vadd.f32 %v49, %v123
    %v125 = vpop.f32.mrf.mxu0
    %v126 = vadd.f32 %v49, %v125
    %127 = vmatmul.bf16.gmra.mxu0 %v88
    %v128 = vpop.f32.mrf.mxu0
    %v129 = vadd.f32 %v49, %v128
    %v130 = vpop.f32.mrf.mxu0
    %v131 = vadd.f32 %v49, %v130
    %132 = vmatmul.bf16.gmra.mxu0 %v91
    %v133 = vpop.f32.mrf.mxu0
    %v134 = vadd.f32 %v49, %v133
    %v135 = vpop.f32.mrf.mxu0
    %v136 = vadd.f32 %v49, %v135
    %137 = vmatmul.bf16.gmra.mxu0 %v94
    %v138 = vpop.f32.mrf.mxu0
    %v139 = vadd.f32 %v49, %v138
    %v140 = vpop.f32.mrf.mxu0
    %v141 = vadd.f32 %v49, %v140
    %142 = vmatmul.bf16.gmra.mxu0 %v97
    %v143 = vpop.f32.mrf.mxu0
    %v144 = vadd.f32 %v49, %v143
    %v145 = vpop.f32.mrf.mxu0
    %v146 = vadd.f32 %v49, %v145
    %147 = vdwg.mxu0
    %v148 = vld [vmem:[%s2 + $0x1] sm:$0x1]
    %v149 = vld [vmem:[%s2 + $0x2] sm:$0x1]
    %150 = vadd.xlane.f32.xlu0 %v109
    %v151 = vpop.xlane.xlu0 %150
    %152 = vadd.xlane.f32.xlu0 %v111
    %v153 = vpop.xlane.xlu0 %152
    %154 = vadd.xlane.f32.xlu0 %v114
    %v155 = vpop.xlane.xlu0 %154
    %156 = vadd.xlane.f32.xlu0 %v116
    %v157 = vpop.xlane.xlu0 %156
    %158 = vadd.xlane.f32.xlu0 %v119
    %v159 = vpop.xlane.xlu0 %158
    %160 = vadd.xlane.f32.xlu0 %v121
    %v161 = vpop.xlane.xlu0 %160
    %162 = vadd.xlane.f32.xlu0 %v124
    %v163 = vpop.xlane.xlu0 %162
    %164 = vadd.xlane.f32.xlu0 %v126
    %v165 = vpop.xlane.xlu0 %164
    %166 = vadd.xlane.f32.xlu0 %v129
    %v167 = vpop.xlane.xlu0 %166
    %168 = vadd.xlane.f32.xlu0 %v131
    %v169 = vpop.xlane.xlu0 %168
    %170 = vadd.xlane.f32.xlu0 %v134
    %v171 = vpop.xlane.xlu0 %170
    %172 = vadd.xlane.f32.xlu0 %v136
    %v173 = vpop.xlane.xlu0 %172
    %174 = vadd.xlane.f32.xlu0 %v139
    %v175 = vpop.xlane.xlu0 %174
    %176 = vadd.xlane.f32.xlu0 %v141
    %v177 = vpop.xlane.xlu0 %176
    %178 = vadd.xlane.f32.xlu0 %v144
    %v179 = vpop.xlane.xlu0 %178
    %180 = vadd.xlane.f32.xlu0 %v146
    %v181 = vpop.xlane.xlu0 %180
    %v182 = vmul.f32 %v109, %v109
    %v183 = vmul.f32 %v111, %v111
    %v184 = vmul.f32 %v114, %v114
    %v185 = vmul.f32 %v116, %v116
    %v186 = vmul.f32 %v119, %v119
    %v187 = vmul.f32 %v121, %v121
    %v188 = vmul.f32 %v124, %v124
    %v189 = vmul.f32 %v126, %v126
    %v190 = vmul.f32 %v129, %v129
    %v191 = vmul.f32 %v131, %v131
    %v192 = vmul.f32 %v134, %v134
    %v193 = vmul.f32 %v136, %v136
    %v194 = vmul.f32 %v139, %v139
    %v195 = vmul.f32 %v141, %v141
    %v196 = vmul.f32 %v144, %v144
    %v197 = vmul.f32 %v146, %v146
    %198 = vadd.xlane.f32.xlu0 %v182
    %v199 = vpop.xlane.xlu0 %198
    %200 = vadd.xlane.f32.xlu0 %v183
    %v201 = vpop.xlane.xlu0 %200
    %202 = vadd.xlane.f32.xlu0 %v184
    %v203 = vpop.xlane.xlu0 %202
    %204 = vadd.xlane.f32.xlu0 %v185
    %v205 = vpop.xlane.xlu0 %204
    %206 = vadd.xlane.f32.xlu0 %v186
    %v207 = vpop.xlane.xlu0 %206
    %208 = vadd.xlane.f32.xlu0 %v187
    %v209 = vpop.xlane.xlu0 %208
    %210 = vadd.xlane.f32.xlu0 %v188
    %v211 = vpop.xlane.xlu0 %210
    %212 = vadd.xlane.f32.xlu0 %v189
    %v213 = vpop.xlane.xlu0 %212
    %214 = vadd.xlane.f32.xlu0 %v190
    %v215 = vpop.xlane.xlu0 %214
    %216 = vadd.xlane.f32.xlu0 %v191
    %v217 = vpop.xlane.xlu0 %216
    %218 = vadd.xlane.f32.xlu0 %v192
    %v219 = vpop.xlane.xlu0 %218
    %220 = vadd.xlane.f32.xlu0 %v193
    %v221 = vpop.xlane.xlu0 %220
    %222 = vadd.xlane.f32.xlu0 %v194
    %v223 = vpop.xlane.xlu0 %222
    %224 = vadd.xlane.f32.xlu0 %v195
    %v225 = vpop.xlane.xlu0 %224
    %226 = vadd.xlane.f32.xlu0 %v196
    %v227 = vpop.xlane.xlu0 %226
    %228 = vadd.xlane.f32.xlu0 %v197
    %v229 = vpop.xlane.xlu0 %228
    %v230 = vmul.f32 %v151, 0.03125
    %v231 = vmul.f32 %v153, 0.03125
    %v232 = vmul.f32 %v155, 0.03125
    %v233 = vmul.f32 %v157, 0.03125
    %v234 = vmul.f32 %v159, 0.03125
    %v235 = vmul.f32 %v161, 0.03125
    %v236 = vmul.f32 %v163, 0.03125
    %v237 = vmul.f32 %v165, 0.03125
    %v238 = vmul.f32 %v167, 0.03125
    %v239 = vmul.f32 %v169, 0.03125
    %v240 = vmul.f32 %v171, 0.03125
    %v241 = vmul.f32 %v173, 0.03125
    %v242 = vmul.f32 %v175, 0.03125
    %v243 = vmul.f32 %v177, 0.03125
    %v244 = vmul.f32 %v179, 0.03125
    %v245 = vmul.f32 %v181, 0.03125
    %v246 = vmul.f32 %v199, 0.03125
    %v247 = vmul.f32 %v201, 0.03125
    %v248 = vmul.f32 %v203, 0.03125
    %v249 = vmul.f32 %v205, 0.03125
    %v250 = vmul.f32 %v207, 0.03125
    %v251 = vmul.f32 %v209, 0.03125
    %v252 = vmul.f32 %v211, 0.03125
    %v253 = vmul.f32 %v213, 0.03125
    %v254 = vmul.f32 %v215, 0.03125
    %v255 = vmul.f32 %v217, 0.03125
    %v256 = vmul.f32 %v219, 0.03125
    %v257 = vmul.f32 %v221, 0.03125
    %v258 = vmul.f32 %v223, 0.03125
    %v259 = vmul.f32 %v225, 0.03125
    %v260 = vmul.f32 %v227, 0.03125
    %v261 = vmul.f32 %v229, 0.03125
    %v262 = vmul.f32 %v230, %v230
    %v263 = vmul.f32 %v231, %v231
    %v264 = vmul.f32 %v232, %v232
    %v265 = vmul.f32 %v233, %v233
    %v266 = vmul.f32 %v234, %v234
    %v267 = vmul.f32 %v235, %v235
    %v268 = vmul.f32 %v236, %v236
    %v269 = vmul.f32 %v237, %v237
    %v270 = vmul.f32 %v238, %v238
    %v271 = vmul.f32 %v239, %v239
    %v272 = vmul.f32 %v240, %v240
    %v273 = vmul.f32 %v241, %v241
    %v274 = vmul.f32 %v242, %v242
    %v275 = vmul.f32 %v243, %v243
    %v276 = vmul.f32 %v244, %v244
    %v277 = vmul.f32 %v245, %v245
    %v278 = vsub.f32 %v246, %v262
    %v279 = vsub.f32 %v247, %v263
    %v280 = vsub.f32 %v248, %v264
    %v281 = vsub.f32 %v249, %v265
    %v282 = vsub.f32 %v250, %v266
    %v283 = vsub.f32 %v251, %v267
    %v284 = vsub.f32 %v252, %v268
    %v285 = vsub.f32 %v253, %v269
    %v286 = vsub.f32 %v254, %v270
    %v287 = vsub.f32 %v255, %v271
    %v288 = vsub.f32 %v256, %v272
    %v289 = vsub.f32 %v257, %v273
    %v290 = vsub.f32 %v258, %v274
    %v291 = vsub.f32 %v259, %v275
    %v292 = vsub.f32 %v260, %v276
    %v293 = vsub.f32 %v261, %v277
    %v294 = vsub.f32 %v109, %v230
    %v295 = vsub.f32 %v111, %v231
    %v296 = vsub.f32 %v114, %v232
    %v297 = vsub.f32 %v116, %v233
    %v298 = vsub.f32 %v119, %v234
    %v299 = vsub.f32 %v121, %v235
    %v300 = vsub.f32 %v124, %v236
    %v301 = vsub.f32 %v126, %v237
    %v302 = vsub.f32 %v129, %v238
    %v303 = vsub.f32 %v131, %v239
    %v304 = vsub.f32 %v134, %v240
    %v305 = vsub.f32 %v136, %v241
    %v306 = vsub.f32 %v139, %v242
    %v307 = vsub.f32 %v141, %v243
    %v308 = vsub.f32 %v144, %v244
    %v309 = vsub.f32 %v146, %v245
    %v310 = vadd.f32 %v278, 1e-06
    %v311 = vadd.f32 %v279, 1e-06
    %v312 = vadd.f32 %v280, 1e-06
    %v313 = vadd.f32 %v281, 1e-06
    %v314 = vadd.f32 %v282, 1e-06
    %v315 = vadd.f32 %v283, 1e-06
    %v316 = vadd.f32 %v284, 1e-06
    %v317 = vadd.f32 %v285, 1e-06
    %v318 = vadd.f32 %v286, 1e-06
    %v319 = vadd.f32 %v287, 1e-06
    %v320 = vadd.f32 %v288, 1e-06
    %v321 = vadd.f32 %v289, 1e-06
    %v322 = vadd.f32 %v290, 1e-06
    %v323 = vadd.f32 %v291, 1e-06
    %v324 = vadd.f32 %v292, 1e-06
    %v325 = vadd.f32 %v293, 1e-06
    %v326 = vrsqrt.pop %v310
    %v327 = vmul.f32 %v326, %v310
    %v328 = vmul.f32 %v327, %v326
    %v329 = vmul.f32 0.5, %v328
    %v330 = vsub.f32 1.5, %v329
    %v331 = vmul.f32 %v326, %v330
    %vm332 = vweird.f32 %v310
    %vm333 = vweird.f32 %v326
    %vm334 = vmor %vm332, %vm333
    %v335 = vsel %vm334, %v326, %v331
    %v336 = vrsqrt.pop %v311
    %v337 = vmul.f32 %v336, %v311
    %v338 = vmul.f32 %v337, %v336
    %v339 = vmul.f32 0.5, %v338
    %v340 = vsub.f32 1.5, %v339
    %v341 = vmul.f32 %v336, %v340
    %vm342 = vweird.f32 %v311
    %vm343 = vweird.f32 %v336
    %vm344 = vmor %vm342, %vm343
    %v345 = vsel %vm344, %v336, %v341
    %v346 = vrsqrt.pop %v312
    %v347 = vmul.f32 %v346, %v312
    %v348 = vmul.f32 %v347, %v346
    %v349 = vmul.f32 0.5, %v348
    %v350 = vsub.f32 1.5, %v349
    %v351 = vmul.f32 %v346, %v350
    %vm352 = vweird.f32 %v312
    %vm353 = vweird.f32 %v346
    %vm354 = vmor %vm352, %vm353
    %v355 = vsel %vm354, %v346, %v351
    %v356 = vrsqrt.pop %v313
    %v357 = vmul.f32 %v356, %v313
    %v358 = vmul.f32 %v357, %v356
    %v359 = vmul.f32 0.5, %v358
    %v360 = vsub.f32 1.5, %v359
    %v361 = vmul.f32 %v356, %v360
    %vm362 = vweird.f32 %v313
    %vm363 = vweird.f32 %v356
    %vm364 = vmor %vm362, %vm363
    %v365 = vsel %vm364, %v356, %v361
    %v366 = vrsqrt.pop %v314
    %v367 = vmul.f32 %v366, %v314
    %v368 = vmul.f32 %v367, %v366
    %v369 = vmul.f32 0.5, %v368
    %v370 = vsub.f32 1.5, %v369
    %v371 = vmul.f32 %v366, %v370
    %vm372 = vweird.f32 %v314
    %vm373 = vweird.f32 %v366
    %vm374 = vmor %vm372, %vm373
    %v375 = vsel %vm374, %v366, %v371
    %v376 = vrsqrt.pop %v315
    %v377 = vmul.f32 %v376, %v315
    %v378 = vmul.f32 %v377, %v376
    %v379 = vmul.f32 0.5, %v378
    %v380 = vsub.f32 1.5, %v379
    %v381 = vmul.f32 %v376, %v380
    %vm382 = vweird.f32 %v315
    %vm383 = vweird.f32 %v376
    %vm384 = vmor %vm382, %vm383
    %v385 = vsel %vm384, %v376, %v381
    %v386 = vrsqrt.pop %v316
    %v387 = vmul.f32 %v386, %v316
    %v388 = vmul.f32 %v387, %v386
    %v389 = vmul.f32 0.5, %v388
    %v390 = vsub.f32 1.5, %v389
    %v391 = vmul.f32 %v386, %v390
    %vm392 = vweird.f32 %v316
    %vm393 = vweird.f32 %v386
    %vm394 = vmor %vm392, %vm393
    %v395 = vsel %vm394, %v386, %v391
    %v396 = vrsqrt.pop %v317
    %v397 = vmul.f32 %v396, %v317
    %v398 = vmul.f32 %v397, %v396
    %v399 = vmul.f32 0.5, %v398
    %v400 = vsub.f32 1.5, %v399
    %v401 = vmul.f32 %v396, %v400
    %vm402 = vweird.f32 %v317
    %vm403 = vweird.f32 %v396
    %vm404 = vmor %vm402, %vm403
    %v405 = vsel %vm404, %v396, %v401
    %v406 = vrsqrt.pop %v318
    %v407 = vmul.f32 %v406, %v318
    %v408 = vmul.f32 %v407, %v406
    %v409 = vmul.f32 0.5, %v408
    %v410 = vsub.f32 1.5, %v409
    %v411 = vmul.f32 %v406, %v410
    %vm412 = vweird.f32 %v318
    %vm413 = vweird.f32 %v406
    %vm414 = vmor %vm412, %vm413
    %v415 = vsel %vm414, %v406, %v411
    %v416 = vrsqrt.pop %v319
    %v417 = vmul.f32 %v416, %v319
    %v418 = vmul.f32 %v417, %v416
    %v419 = vmul.f32 0.5, %v418
    %v420 = vsub.f32 1.5, %v419
    %v421 = vmul.f32 %v416, %v420
    %vm422 = vweird.f32 %v319
    %vm423 = vweird.f32 %v416
    %vm424 = vmor %vm422, %vm423
    %v425 = vsel %vm424, %v416, %v421
    %v426 = vrsqrt.pop %v320
    %v427 = vmul.f32 %v426, %v320
    %v428 = vmul.f32 %v427, %v426
    %v429 = vmul.f32 0.5, %v428
    %v430 = vsub.f32 1.5, %v429
    %v431 = vmul.f32 %v426, %v430
    %vm432 = vweird.f32 %v320
    %vm433 = vweird.f32 %v426
    %vm434 = vmor %vm432, %vm433
    %v435 = vsel %vm434, %v426, %v431
    %v436 = vrsqrt.pop %v321
    %v437 = vmul.f32 %v436, %v321
    %v438 = vmul.f32 %v437, %v436
    %v439 = vmul.f32 0.5, %v438
    %v440 = vsub.f32 1.5, %v439
    %v441 = vmul.f32 %v436, %v440
    %vm442 = vweird.f32 %v321
    %vm443 = vweird.f32 %v436
    %vm444 = vmor %vm442, %vm443
    %v445 = vsel %vm444, %v436, %v441
    %v446 = vrsqrt.pop %v322
    %v447 = vmul.f32 %v446, %v322
    %v448 = vmul.f32 %v447, %v446
    %v449 = vmul.f32 0.5, %v448
    %v450 = vsub.f32 1.5, %v449
    %v451 = vmul.f32 %v446, %v450
    %vm452 = vweird.f32 %v322
    %vm453 = vweird.f32 %v446
    %vm454 = vmor %vm452, %vm453
    %v455 = vsel %vm454, %v446, %v451
    %v456 = vrsqrt.pop %v323
    %v457 = vmul.f32 %v456, %v323
    %v458 = vmul.f32 %v457, %v456
    %v459 = vmul.f32 0.5, %v458
    %v460 = vsub.f32 1.5, %v459
    %v461 = vmul.f32 %v456, %v460
    %vm462 = vweird.f32 %v323
    %vm463 = vweird.f32 %v456
    %vm464 = vmor %vm462, %vm463
    %v465 = vsel %vm464, %v456, %v461
    %v466 = vrsqrt.pop %v324
    %v467 = vmul.f32 %v466, %v324
    %v468 = vmul.f32 %v467, %v466
    %v469 = vmul.f32 0.5, %v468
    %v470 = vsub.f32 1.5, %v469
    %v471 = vmul.f32 %v466, %v470
    %vm472 = vweird.f32 %v324
    %vm473 = vweird.f32 %v466
    %vm474 = vmor %vm472, %vm473
    %v475 = vsel %vm474, %v466, %v471
    %v476 = vrsqrt.pop %v325
    %v477 = vmul.f32 %v476, %v325
    %v478 = vmul.f32 %v477, %v476
    %v479 = vmul.f32 0.5, %v478
    %v480 = vsub.f32 1.5, %v479
    %v481 = vmul.f32 %v476, %v480
    %vm482 = vweird.f32 %v325
    %vm483 = vweird.f32 %v476
    %vm484 = vmor %vm482, %vm483
    %v485 = vsel %vm484, %v476, %v481
    %v486 = vmul.f32 %v294, %v335
    %v487 = vmul.f32 %v295, %v345
    %v488 = vmul.f32 %v296, %v355
    %v489 = vmul.f32 %v297, %v365
    %v490 = vmul.f32 %v298, %v375
    %v491 = vmul.f32 %v299, %v385
    %v492 = vmul.f32 %v300, %v395
    %v493 = vmul.f32 %v301, %v405
    %v494 = vmul.f32 %v302, %v415
    %v495 = vmul.f32 %v303, %v425
    %v496 = vmul.f32 %v304, %v435
    %v497 = vmul.f32 %v305, %v445
    %v498 = vmul.f32 %v306, %v455
    %v499 = vmul.f32 %v307, %v465
    %v500 = vmul.f32 %v308, %v475
    %v501 = vmul.f32 %v309, %v485
    %v502 = vperm.slane %v148, 0
    %v503 = vmul.f32 %v486, %v502
    %v504 = vmul.f32 %v487, %v502
    %v505 = vmul.f32 %v488, %v502
    %v506 = vmul.f32 %v489, %v502
    %v507 = vmul.f32 %v490, %v502
    %v508 = vmul.f32 %v491, %v502
    %v509 = vmul.f32 %v492, %v502
    %v510 = vmul.f32 %v493, %v502
    %v511 = vmul.f32 %v494, %v502
    %v512 = vmul.f32 %v495, %v502
    %v513 = vmul.f32 %v496, %v502
    %v514 = vmul.f32 %v497, %v502
    %v515 = vmul.f32 %v498, %v502
    %v516 = vmul.f32 %v499, %v502
    %v517 = vmul.f32 %v500, %v502
    %v518 = vmul.f32 %v501, %v502
    %v519 = vperm.slane %v149, 0
    %v520 = vadd.f32 %v503, %v519
    %v521 = vadd.f32 %v504, %v519
    %v522 = vadd.f32 %v505, %v519
    %v523 = vadd.f32 %v506, %v519
    %v524 = vadd.f32 %v507, %v519
    %v525 = vadd.f32 %v508, %v519
    %v526 = vadd.f32 %v509, %v519
    %v527 = vadd.f32 %v510, %v519
    %v528 = vadd.f32 %v511, %v519
    %v529 = vadd.f32 %v512, %v519
    %v530 = vadd.f32 %v513, %v519
    %v531 = vadd.f32 %v514, %v519
    %v532 = vadd.f32 %v515, %v519
    %v533 = vadd.f32 %v516, %v519
    %v534 = vadd.f32 %v517, %v519
    %v535 = vadd.f32 %v518, %v519
    %536 = vst [vmem:[#allocation2] sm:$0xff] %v520
    %537 = vst [vmem:[#allocation2 + $0x8] sm:$0xff] %v521
    %538 = vst [vmem:[#allocation2 + $0x10] sm:$0xff] %v522
    %539 = vst [vmem:[#allocation2 + $0x18] sm:$0xff] %v523
    %540 = vst [vmem:[#allocation2 + $0x20] sm:$0xff] %v524
    %541 = vst [vmem:[#allocation2 + $0x28] sm:$0xff] %v525
    %542 = vst [vmem:[#allocation2 + $0x30] sm:$0xff] %v526
    %543 = vst [vmem:[#allocation2 + $0x38] sm:$0xff] %v527
    %544 = vst [vmem:[#allocation2 + $0x40] sm:$0xff] %v528
    %545 = vst [vmem:[#allocation2 + $0x48] sm:$0xff] %v529
    %546 = vst [vmem:[#allocation2 + $0x50] sm:$0xff] %v530
    %547 = vst [vmem:[#allocation2 + $0x58] sm:$0xff] %v531
    %548 = vst [vmem:[#allocation2 + $0x60] sm:$0xff] %v532
    %549 = vst [vmem:[#allocation2 + $0x68] sm:$0xff] %v533
    %550 = vst [vmem:[#allocation2 + $0x70] sm:$0xff] %v534
    %551 = vst [vmem:[#allocation2 + $0x78] sm:$0xff] %v535
    // Predicated region
    $region14: #{tpu_custom_call.1} parent=1 // pred_check
      _
    $region15: #{tpu_custom_call.1} parent=1 // pred_check_branch
      %553 = sbr.rel (0) target = $region17
    $region16: #{tpu_custom_call.1} parent=1 // pred_region
      %555 = vsyncadd [#allocation3], 0
      %s556 = sshll.u32 [#allocation2], 4
      %s557 = int_to_ptr.vmem [resolvable:$true] %s556
      %s558 = sshll.u32 %s3, 4
      %s559 = int_to_ptr.hbm [resolvable:$true] %s558
      %564 = dma.vmem_to_hbm [thread:$0]  %s557, 2048, %s559, [#allocation3], 128, 128, 8
    $region17: #{tpu_custom_call.1} parent=1 // pred_fallthru
      _
    // Predicated region
    $region18: #{tpu_custom_call.1} parent=1 // pred_check
      _
    $region19: #{tpu_custom_call.1} parent=1 // pred_check_branch
      %566 = sbr.rel (0) target = $region21
    $region20: #{tpu_custom_call.1} parent=1 // pred_region
      %568 = dma.done [#allocation3], 2048
    $region21: #{tpu_custom_call.1} parent=1 // pred_fallthru
      _
    %569 = vsyncpa [#allocation3], 1

</llo_original>
